<compile_context>
chip_gen: v5e
topology: v5e:2x2
jax: 0.10.0
libtpu: 0.0.40
codegen_flags: <defaults>
</compile_context>

<pallas_src>
import jax
import jax.numpy as jnp
from jax.experimental import pallas as pl
from jax.experimental.pallas import tpu as pltpu


def _round_up(n, m):
    return ((n + m - 1) // m) * m


def _vmem_capacity_bytes():
    """Per-core VMEM capacity; conservative 64 MiB fallback (v7x)."""
    try:
        info = pltpu.get_tpu_info()
        cap = getattr(info, "vmem_capacity_bytes", None)
        if cap:
            return int(cap)
    except Exception:
        pass
    return 64 * 1024 * 1024


def _insight_kernel(x_ref, w1_ref, bias_ref, w2_ref, b2_ref, out_ref):
    # Fused Linear1 + folded BatchNorm: y = x @ W1' + bias'.
    # x / W1' are bf16 in VMEM; MXU accumulates in f32.
    y = jnp.dot(x_ref[...], w1_ref[...], preferred_element_type=jnp.float32)
    h = jnp.maximum(y + bias_ref[...], 0.0)                     # (bm, H) f32, ReLU
    # Linear2 (H -> 1): VPU multiply + lane (XLU) reduction; b2 is an SMEM scalar.
    o = jnp.sum(h * w2_ref[...], axis=-1) + b2_ref[0]           # (bm,)
    # Lane-dense store: one (1, 1, bm) row per grid step.  The (bm,) -> (1,1,bm)
    # relayout is an XLU transpose; XLU has slack in this kernel so it is free filler.
    out_ref[...] = o.reshape(out_ref.shape).astype(out_ref.dtype)


def insight_classifier_forward(x, params, *, bm=2048, eps=1e-5):
    """InsightClassifier forward (eval mode). Returns logits of shape (batch,)."""
    w1, b1 = params["w1"], params["b1"]
    gamma, beta = params["gamma"], params["beta"]
    mean, var = params["running_mean"], params["running_var"]
    w2, b2 = params["w2"], params["b2"]

    B, D = x.shape
    H = w1.shape[1]

    # Fold BatchNorm (eval) + first-layer bias into the weights (constants only;
    # the streamed input x is untouched, so this is a free one-time transform).
    scale = gamma / jnp.sqrt(var + eps)                          # (H,)
    w1_f = (w1 * scale[None, :]).astype(jnp.bfloat16)            # (D, H) bf16
    bias_f = ((b1 - mean) * scale + beta).reshape(1, H).astype(jnp.float32)
    w2_row = w2.reshape(1, H).astype(jnp.float32)                # (1, H)
    b2_s = b2.reshape(1).astype(jnp.float32)                     # (1,) SMEM scalar

    x_bf = x.astype(jnp.bfloat16)                                # halves HBM traffic

    # --- Batch tile selection ---------------------------------------------------
    # Lane-aligned (multiple of 128); cap so there are >=2 grid tiles whenever B
    # allows, so a "parallel" grid axis can shard across both v7x TensorCores.
    bm_req = max(128, _round_up(int(bm), 128))
    bm_eff = min(bm_req, _round_up(pl.cdiv(B, 2), 128))
    bm_eff = max(128, _round_up(bm_eff, 128))

    # VMEM budget: double-buffered bf16 x tiles + W1' (counted twice to be safe
    # about a second resident copy) + small bias/w2/output buffers.
    def _needed(bm_):
        return (2 * bm_ * D * 2          # x tiles, bf16, double-buffered
                + 2 * D * H * 2          # W1' bf16 (conservatively 2 copies)
                + 2 * 2 * H * 4          # folded bias + w2 row
                + 2 * bm_ * 4)           # (1,1,bm) f32 output, double-buffered

    usable = int(0.75 * _vmem_capacity_bytes())   # 48 MiB on v7x, 96 MiB on v5e/v6e
    while bm_eff > 128 and _needed(bm_eff) > usable:
        bm_eff -= 128

    num_tiles = pl.cdiv(B, bm_eff)
    vmem_limit = int(min(usable, max(32 * 1024 * 1024, 2 * _needed(bm_eff))))

    out = pl.pallas_call(
        _insight_kernel,
        out_shape=jax.ShapeDtypeStruct((num_tiles, 1, bm_eff), jnp.float32),
        grid_spec=pltpu.PrefetchScalarGridSpec(
            num_scalar_prefetch=0,
            grid=(num_tiles,),
            in_specs=[
                # x tile; the final block may run past B -- Pallas pads it and the
                # resulting garbage rows only reach outputs discarded by [:B].
                pl.BlockSpec((bm_eff, D), lambda i: (i, 0)),
                pl.BlockSpec((D, H), lambda i: (0, 0)),          # W1' (resident)
                pl.BlockSpec((1, H), lambda i: (0, 0)),          # folded bias
                pl.BlockSpec((1, H), lambda i: (0, 0)),          # w2 as lane row
                pl.BlockSpec(memory_space=pltpu.MemorySpace.SMEM),  # b2 scalar
            ],
            out_specs=pl.BlockSpec((1, 1, bm_eff), lambda i: (i, 0, 0)),
        ),
        compiler_params=pltpu.CompilerParams(
            dimension_semantics=("parallel",),
            vmem_limit_bytes=vmem_limit,
        ),
    )(x_bf, w1_f, bias_f, w2_row, b2_s)

    # Flatten lane-dense tiles back to (num_tiles*bm_eff,) and drop padded rows.
    return out.reshape(num_tiles * bm_eff)[:B]


def make_params(key, input_dim, hidden_dim):
    """Deterministic synthetic parameters (same shapes as the PyTorch __init__)."""
    k1, k2, k3, k4, k5, k6 = jax.random.split(key, 6)
    w1 = jax.random.normal(k1, (input_dim, hidden_dim), jnp.float32) * 0.02
    b1 = jax.random.normal(k2, (hidden_dim,), jnp.float32) * 0.01
    gamma = 1.0 + 0.1 * jax.random.normal(k3, (hidden_dim,), jnp.float32)
    beta = 0.05 * jax.random.normal(k4, (hidden_dim,), jnp.float32)
    running_mean = 0.1 * jax.random.normal(k5, (hidden_dim,), jnp.float32)
    running_var = jnp.abs(1.0 + 0.1 * jax.random.normal(k6, (hidden_dim,), jnp.float32))
    w2 = jax.random.normal(k1, (hidden_dim, 1), jnp.float32) * 0.05
    b2 = jnp.array([0.03], jnp.float32)
    return dict(w1=w1, b1=b1, gamma=gamma, beta=beta,
                running_mean=running_mean, running_var=running_var,
                w2=w2, b2=b2)


def _reference_forward(x, params, eps=1e-5):
    """Pure-JAX f32 reference for the sanity check."""
    y = jnp.dot(x, params["w1"], precision=jax.lax.Precision.HIGHEST) + params["b1"]
    z = (y - params["running_mean"]) / jnp.sqrt(params["running_var"] + eps)
    z = z * params["gamma"] + params["beta"]
    h = jnp.maximum(z, 0.0)
    o = jnp.dot(h, params["w2"], precision=jax.lax.Precision.HIGHEST) + params["b2"]
    return o[:, 0]


if __name__ == "__main__":
    # Small shapes consistent with the module's (batch, input_dim) interface.
    # batch is deliberately NOT a multiple of the tile, exercising the partial
    # last-block path (no jnp.pad copy of x).
    batch, input_dim, hidden_dim = 200, 256, 128
    key = jax.random.PRNGKey(0)
    kx, kp = jax.random.split(key)
    x = jax.random.normal(kx, (batch, input_dim), jnp.float32)
    params = make_params(kp, input_dim, hidden_dim)

    ref = _reference_forward(x, params)

    # Default path: bm request 2048 is capped to 128 here so the grid has 2 tiles
    # (both v7x TensorCores get work); second tile is partial (200 rows -> 128+72).
    logits = insight_classifier_forward(x, params)
    logits = jax.block_until_ready(logits)
    assert logits.shape == (batch,)
    max_err = float(jnp.max(jnp.abs(logits - ref)))
    # bf16 inputs with f32 accumulation -> looser tolerance than a pure-f32 kernel.
    assert jnp.allclose(logits, ref, atol=1e-2, rtol=1e-2), max_err

    # Explicit small-tile request still goes through the same capping/rounding.
    logits2 = insight_classifier_forward(x, params, bm=256)
    logits2 = jax.block_until_ready(logits2)
    assert logits2.shape == (batch,)
    assert jnp.allclose(logits2, ref, atol=1e-2, rtol=1e-2), (
        float(jnp.max(jnp.abs(logits2 - ref))))

    print("KERNEL_OK")
</pallas_src>

<mosaic_0001>
module attributes {stable_mosaic.version = 11 : i64} {
  func.func @_insight_kernel(%arg0: i32, %arg1: memref<128x256xbf16, #tpu.memory_space<vmem>>, %arg2: memref<256x128xbf16, #tpu.memory_space<vmem>>, %arg3: memref<1x128xf32, #tpu.memory_space<vmem>>, %arg4: memref<1x128xf32, #tpu.memory_space<vmem>>, %arg5: memref<1xf32, #tpu.memory_space<smem>>, %arg6: memref<1x1x128xf32, #tpu.memory_space<vmem>>) attributes {dimension_semantics = [#tpu.dimension_semantics<parallel>], iteration_bounds = array<i64: 2>, scalar_prefetch = 0 : i64, scratch_operands = 0 : i64, tpu.core_type = #tpu.core_type<tc>, window_params = [{transform_indices = @transform_0, window_bounds = array<i64: 128, 256>}, {pipeline_mode = #tpu.pipeline_mode<synchronous>, transform_indices = @transform_1, window_bounds = array<i64: 256, 128>}, {pipeline_mode = #tpu.pipeline_mode<synchronous>, transform_indices = @transform_2, window_bounds = array<i64: 1, 128>}, {pipeline_mode = #tpu.pipeline_mode<synchronous>, transform_indices = @transform_3, window_bounds = array<i64: 1, 128>}, {transform_indices = @transform_4, window_bounds = array<i64: 1>}, {transform_indices = @transform_5, window_bounds = array<i64: 1, 1, 128>}]} {
    %c0 = arith.constant 0 : index
    %c0_0 = arith.constant 0 : index
    %0 = vector.load %arg1[%c0, %c0_0] : memref<128x256xbf16, #tpu.memory_space<vmem>>, vector<128x256xbf16>
    %c0_1 = arith.constant 0 : index
    %c0_2 = arith.constant 0 : index
    %1 = vector.load %arg2[%c0_1, %c0_2] : memref<256x128xbf16, #tpu.memory_space<vmem>>, vector<256x128xbf16>
    %cst = arith.constant dense<0.000000e+00> : vector<128x128xf32>
    %2 = tpu.matmul %0, %1, %cst {dimension_numbers = #tpu.dot_dimension_numbers<[1], [0], [0], [1], [0, 0, 1, 1], [], []>} : vector<128x256xbf16>, vector<256x128xbf16>, vector<128x128xf32> -> vector<128x128xf32>
    %c0_3 = arith.constant 0 : index
    %c0_4 = arith.constant 0 : index
    %3 = vector.load %arg3[%c0_3, %c0_4] : memref<1x128xf32, #tpu.memory_space<vmem>>, vector<1x128xf32>
    %4 = vector.broadcast %3 : vector<1x128xf32> to vector<128x128xf32>
    %5 = arith.addf %2, %4 : vector<128x128xf32>
    %cst_5 = arith.constant 0.000000e+00 : f32
    %6 = vector.broadcast %cst_5 : f32 to vector<128x128xf32>
    %7 = arith.maximumf %5, %6 : vector<128x128xf32>
    %c0_6 = arith.constant 0 : index
    %c0_7 = arith.constant 0 : index
    %8 = vector.load %arg4[%c0_6, %c0_7] : memref<1x128xf32, #tpu.memory_space<vmem>>, vector<1x128xf32>
    %9 = vector.broadcast %8 : vector<1x128xf32> to vector<128x128xf32>
    %10 = arith.mulf %7, %9 : vector<128x128xf32>
    %cst_8 = arith.constant dense<0.000000e+00> : vector<128xf32>
    %11 = vector.multi_reduction <add>, %10, %cst_8 [1] : vector<128x128xf32> to vector<128xf32>
    %c0_9 = arith.constant 0 : index
    %12 = memref.load %arg5[%c0_9] : memref<1xf32, #tpu.memory_space<smem>>
    %13 = vector.broadcast %12 : f32 to vector<128xf32>
    %14 = arith.addf %11, %13 : vector<128xf32>
    %15 = vector.shape_cast %14 : vector<128xf32> to vector<1x1x128xf32>
    %c0_10 = arith.constant 0 : index
    %c0_11 = arith.constant 0 : index
    %c0_12 = arith.constant 0 : index
    %16 = vector.load %arg6[%c0_10, %c0_11, %c0_12] : memref<1x1x128xf32, #tpu.memory_space<vmem>>, vector<1x1x128xf32>
    tpu.vector_store %arg6[%c0_10, %c0_11, %c0_12], %15 {strides = array<i32>} : memref<1x1x128xf32, #tpu.memory_space<vmem>>, vector<1x1x128xf32>,
    return
  }
  func.func @transform_0(%arg0: i32) -> (i32, i32) {
    %c0_i32 = arith.constant 0 : i32
    %c0_i32_0 = arith.constant 0 : i32
    return %arg0, %c0_i32 : i32, i32
  }
  func.func @transform_1(%arg0: i32) -> (i32, i32) {
    %c0_i32 = arith.constant 0 : i32
    %c0_i32_0 = arith.constant 0 : i32
    %c0_i32_1 = arith.constant 0 : i32
    return %c0_i32, %c0_i32_0 : i32, i32
  }
  func.func @transform_2(%arg0: i32) -> (i32, i32) {
    %c0_i32 = arith.constant 0 : i32
    %c0_i32_0 = arith.constant 0 : i32
    %c0_i32_1 = arith.constant 0 : i32
    return %c0_i32, %c0_i32_0 : i32, i32
  }
  func.func @transform_3(%arg0: i32) -> (i32, i32) {
    %c0_i32 = arith.constant 0 : i32
    %c0_i32_0 = arith.constant 0 : i32
    %c0_i32_1 = arith.constant 0 : i32
    return %c0_i32, %c0_i32_0 : i32, i32
  }
  func.func @transform_4(%arg0: i32) -> i32 {
    %c0_i32 = arith.constant 0 : i32
    %c0_i32_0 = arith.constant 0 : i32
    return %c0_i32 : i32
  }
  func.func @transform_5(%arg0: i32) -> (i32, i32, i32) {
    %c0_i32 = arith.constant 0 : i32
    %c0_i32_0 = arith.constant 0 : i32
    %c0_i32_1 = arith.constant 0 : i32
    return %arg0, %c0_i32, %c0_i32_0 : i32, i32, i32
  }
}

</mosaic_0001>

<llo_original>
// kernel: tpu_custom_call.1
$region0: #{tpu_custom_call.1}
  #allocation0 [shape = 'u32[]', space=smem, size = 0x4, offset = 0x4, fixed_abs, tag = 'smem constant byte address 0x4 - core index']
  #allocation1 [shape = 'u32[72,128]{1,0:T(1,128)}', space=vmem, size = 0x9000, scoped, tag = 'internal scratch']
  #allocation2 [shape = 'f32[1]{0:T(128)S(6)}', space=smem, size = 0x200, scoped, tag = 'scoped memory for tpu_custom_call.1']
  %s0 = inlined_call_operand.hbm [shape: bf16[200,256], index: 0, kind: input, shape index: {}]
  %s1 = inlined_call_operand.hbm [shape: bf16[256,128], index: 1, kind: input, shape index: {}]
  %s2 = inlined_call_operand.vmem [shape: f32[1,128], index: 2, kind: input, shape index: {}]
  %s3 = inlined_call_operand.vmem [shape: f32[1,128], index: 3, kind: input, shape index: {}]
  %s4 = inlined_call_operand.<no memory space> [shape: f32[1], index: 4, kind: input, shape index: {}]
  %s5 = inlined_call_operand.hbm [shape: f32[2,1,128], index: 5, kind: output, shape index: {}]
  %s6 = sld [smem:[#allocation0]]
  $region61: #{tpu_custom_call.1} parent=0
    _
  %s8 = ssub.s32 1, %s6
  %s9 = scalar_select 0, %s8, %s6
  %10 = sst [smem:[#allocation2]] %s4
  $region1: #{tpu_custom_call.1} parent=0
    #allocation3 [shape = 'u8[131072]{0}', space=vmem, size = 0x20000, scoped, tag = 'input window, operand 0']
    #allocation4 [shape = 's32[2]{0}', space=sflag, size = 0x8, scoped, tag = 'scoped memory for tpu_custom_call.1']
    #allocation5 [shape = 's32[2]{0}', space=sflag, size = 0x8, scoped, tag = 'scoped memory for tpu_custom_call.1']
    #allocation6 [shape = 'u8[65536]{0}', space=vmem, size = 0x10000, scoped, tag = 'input window, operand 1, single buffered']
    #allocation7 [shape = 's32[1]{0}', space=sflag, size = 0x4, scoped, tag = 'scoped memory for tpu_custom_call.1']
    #allocation8 [shape = 'u8[1024]{0}', space=vmem, size = 0x400, scoped, tag = 'output window, operand 0']
    %11 = vsyncpa [#allocation4], 0
    %s12 = scalar_lea.sflag [#allocation4], 1
    %13 = vsyncpa %s12, 0
    %14 = vsyncpa [#allocation7], 0
    %15 = vsyncpa [#allocation5], 0
    %s16 = scalar_lea.sflag [#allocation5], 1
    %17 = vsyncpa %s16, 0
    loop: start=0, step=1, limit=4
    $region2: #{tpu_custom_call.1} parent=1 // loop_pre_header
      _
    $region3: #{tpu_custom_call.1} parent=1 // loop_header
      %s19 = sphi 0, %s23
      %p20 = scmp.ge.s32.totalorder %s19, 4
      %s29 = sphi 0, %s31
      %s32 = sphi 0, %s29
      %s33 = sphi 0, %s32
      %s49 = sphi 0, %s33
      %s53 = sphi 0, %s53
      %s55 = sphi 0, %s53
      %s56 = sphi 0, %s55
      %s70 = sphi 0, %s56
      %s74 = sphi 0, %s74
      %s76 = sphi 0, %s74
      %s77 = sphi 0, %s76
      %s91 = sphi 0, %s77
      %s95 = sphi 0, %s95
      %s97 = sphi 0, %s95
      %s98 = sphi 0, %s97
      %s112 = sphi 0, %s98
      %s116 = sphi 0, %s116
      %s118 = sphi 0, %s116
      %s119 = sphi 0, %s118
      %s133 = sphi 0, %s119
      %s139 = sphi 0, %s141
      %s142 = sphi 0, %s139
      %s143 = sphi 0, %s142
      %s159 = sphi 0, %s143
    $region4: #{tpu_custom_call.1} parent=1 // loop_header_branch
      %22 = sbr.rel (%p20) target = $region8
    $region5: #{tpu_custom_call.1} parent=1 // loop_body
      %s24 = ssub.s32 %s19, 1
      %s25 = ssub.s32 %s19, 2
      %s26 = sadd.s32 %s19, 1
      %s27 = ssub.s32 %s19, %s26
      %p28 = scmp.eq.s32.totalorder %s27, 0
      %s30 = sadd.s32 %s29, 1
      %s31 = scalar_select %p28, %s29, %s30
      %p34 = pneg %p28
      %p35 = scmp.eq.s32.totalorder %s19, 1
      %p36 = por %p34, %p35
      %p37 = scmp.ne.s32.totalorder %s29, %s32
      %p38 = scmp.eq.s32.totalorder %s19, 0
      %p39 = por %p37, %p38
      %p40 = scmp.ne.s32.totalorder %s29, %s32
      %p41 = scmp.eq.s32.totalorder %s24, 1
      %p42 = por %p40, %p41
      %p43 = scmp.ne.s32.totalorder %s32, %s33
      %p44 = scmp.eq.s32.totalorder %s24, 0
      %p45 = por %p43, %p44
      %p46 = scmp.ne.s32.totalorder %s32, %s33
      %p47 = scmp.eq.s32.totalorder %s25, 1
      %p48 = por %p46, %p47
      %p50 = scmp.ne.s32.totalorder %s33, %s49
      %p51 = scmp.eq.s32.totalorder %s25, 0
      %p52 = por %p50, %p51
      %s54 = sadd.s32 %s53, 1
      %p57 = scmp.eq.s32.totalorder %s19, 1
      %p58 = scmp.ne.s32.totalorder %s53, %s55
      %p59 = scmp.eq.s32.totalorder %s19, 0
      %p60 = por %p58, %p59
      %p61 = scmp.ne.s32.totalorder %s53, %s55
      %p62 = scmp.eq.s32.totalorder %s24, 1
      %p63 = por %p61, %p62
      %p64 = scmp.ne.s32.totalorder %s55, %s56
      %p65 = scmp.eq.s32.totalorder %s24, 0
      %p66 = por %p64, %p65
      %p67 = scmp.ne.s32.totalorder %s55, %s56
      %p68 = scmp.eq.s32.totalorder %s25, 1
      %p69 = por %p67, %p68
      %p71 = scmp.ne.s32.totalorder %s56, %s70
      %p72 = scmp.eq.s32.totalorder %s25, 0
      %p73 = por %p71, %p72
      %s75 = sadd.s32 %s74, 1
      %p78 = scmp.eq.s32.totalorder %s19, 1
      %p79 = scmp.ne.s32.totalorder %s74, %s76
      %p80 = scmp.eq.s32.totalorder %s19, 0
      %p81 = por %p79, %p80
      %p82 = scmp.ne.s32.totalorder %s74, %s76
      %p83 = scmp.eq.s32.totalorder %s24, 1
      %p84 = por %p82, %p83
      %p85 = scmp.ne.s32.totalorder %s76, %s77
      %p86 = scmp.eq.s32.totalorder %s24, 0
      %p87 = por %p85, %p86
      %p88 = scmp.ne.s32.totalorder %s76, %s77
      %p89 = scmp.eq.s32.totalorder %s25, 1
      %p90 = por %p88, %p89
      %p92 = scmp.ne.s32.totalorder %s77, %s91
      %p93 = scmp.eq.s32.totalorder %s25, 0
      %p94 = por %p92, %p93
      %s96 = sadd.s32 %s95, 1
      %p99 = scmp.eq.s32.totalorder %s19, 1
      %p100 = scmp.ne.s32.totalorder %s95, %s97
      %p101 = scmp.eq.s32.totalorder %s19, 0
      %p102 = por %p100, %p101
      %p103 = scmp.ne.s32.totalorder %s95, %s97
      %p104 = scmp.eq.s32.totalorder %s24, 1
      %p105 = por %p103, %p104
      %p106 = scmp.ne.s32.totalorder %s97, %s98
      %p107 = scmp.eq.s32.totalorder %s24, 0
      %p108 = por %p106, %p107
      %p109 = scmp.ne.s32.totalorder %s97, %s98
      %p110 = scmp.eq.s32.totalorder %s25, 1
      %p111 = por %p109, %p110
      %p113 = scmp.ne.s32.totalorder %s98, %s112
      %p114 = scmp.eq.s32.totalorder %s25, 0
      %p115 = por %p113, %p114
      %s117 = sadd.s32 %s116, 1
      %p120 = scmp.eq.s32.totalorder %s19, 1
      %p121 = scmp.ne.s32.totalorder %s116, %s118
      %p122 = scmp.eq.s32.totalorder %s19, 0
      %p123 = por %p121, %p122
      %p124 = scmp.ne.s32.totalorder %s116, %s118
      %p125 = scmp.eq.s32.totalorder %s24, 1
      %p126 = por %p124, %p125
      %p127 = scmp.ne.s32.totalorder %s118, %s119
      %p128 = scmp.eq.s32.totalorder %s24, 0
      %p129 = por %p127, %p128
      %p130 = scmp.ne.s32.totalorder %s118, %s119
      %p131 = scmp.eq.s32.totalorder %s25, 1
      %p132 = por %p130, %p131
      %p134 = scmp.ne.s32.totalorder %s119, %s133
      %p135 = scmp.eq.s32.totalorder %s25, 0
      %p136 = por %p134, %p135
      %s137 = ssub.s32 %s19, %s26
      %p138 = scmp.eq.s32.totalorder %s137, 0
      %s140 = sadd.s32 %s139, 1
      %s141 = scalar_select %p138, %s139, %s140
      %p144 = pneg %p138
      %p145 = scmp.eq.s32.totalorder %s19, 1
      %p146 = por %p144, %p145
      %p147 = scmp.ne.s32.totalorder %s139, %s142
      %p148 = scmp.eq.s32.totalorder %s19, 0
      %p149 = por %p147, %p148
      %p150 = scmp.ne.s32.totalorder %s139, %s142
      %p151 = scmp.eq.s32.totalorder %s24, 1
      %p152 = por %p150, %p151
      %p153 = scmp.ne.s32.totalorder %s142, %s143
      %p154 = scmp.eq.s32.totalorder %s24, 0
      %p155 = por %p153, %p154
      %p156 = scmp.ne.s32.totalorder %s142, %s143
      %p157 = scmp.eq.s32.totalorder %s25, 1
      %p158 = por %p156, %p157
      %p160 = scmp.ne.s32.totalorder %s143, %s159
      %p161 = scmp.eq.s32.totalorder %s25, 0
      %p162 = por %p160, %p161
      %p163 = scmp.le.s32.totalorder 1, %s19
      %p164 = scmp.lt.s32.totalorder %s19, 3
      %p165 = pnand %p163, %p164
      %p166 = pneg %p165
      // Predicated region
      $region9: #{tpu_custom_call.1} parent=5 // pred_check
        _
      $region10: #{tpu_custom_call.1} parent=5 // pred_check_branch
        %168 = sbr.rel (%p165) target = $region12
      $region11: #{tpu_custom_call.1} parent=5 // pred_region
        %s169 = ssub.s32 %s19, 1
        // Predicated region
        $region13: #{tpu_custom_call.1} parent=11 // pred_check
          %p170 = pneg %p66
        $region14: #{tpu_custom_call.1} parent=11 // pred_check_branch
          %172 = sbr.rel (%p170) target = $region16
        $region15: #{tpu_custom_call.1} parent=11 // pred_region
          %174 = vsyncadd [#allocation7], 0
          %s175 = sshll.u32 %s1, 4
          %s176 = int_to_ptr.hbm [resolvable:$true] %s175
          %s177 = sshll.u32 [#allocation6], 4
          %s178 = int_to_ptr.vmem [resolvable:$true] %s177
          %183 = dma.hbm_to_vmem [thread:$0]  %s176, 2048, %s178, [#allocation7], 64, 64, 4
        $region16: #{tpu_custom_call.1} parent=11 // pred_fallthru
          _
        // Predicated region
        $region17: #{tpu_custom_call.1} parent=11 // pred_check
          %p184 = pneg %p87
        $region18: #{tpu_custom_call.1} parent=11 // pred_check_branch
          %186 = sbr.rel (%p184) target = $region20
        $region19: #{tpu_custom_call.1} parent=11 // pred_region
          _
        $region20: #{tpu_custom_call.1} parent=11 // pred_fallthru
          _
        // Predicated region
        $region21: #{tpu_custom_call.1} parent=11 // pred_check
          %p187 = pneg %p108
        $region22: #{tpu_custom_call.1} parent=11 // pred_check_branch
          %189 = sbr.rel (%p187) target = $region24
        $region23: #{tpu_custom_call.1} parent=11 // pred_region
          _
        $region24: #{tpu_custom_call.1} parent=11 // pred_fallthru
          _
        // Predicated region
        $region25: #{tpu_custom_call.1} parent=11 // pred_check
          %p190 = pneg %p129
        $region26: #{tpu_custom_call.1} parent=11 // pred_check_branch
          %192 = sbr.rel (%p190) target = $region28
        $region27: #{tpu_custom_call.1} parent=11 // pred_region
          _
        $region28: #{tpu_custom_call.1} parent=11 // pred_fallthru
          _
      $region12: #{tpu_custom_call.1} parent=5 // pred_fallthru
        _
      %p193 = scmp.lt.s32.totalorder %s19, 2
      // Predicated region
      $region29: #{tpu_custom_call.1} parent=5 // pred_check
        %p194 = pneg %p193
      $region30: #{tpu_custom_call.1} parent=5 // pred_check_branch
        %196 = sbr.rel (%p194) target = $region32
      $region31: #{tpu_custom_call.1} parent=5 // pred_region
        // Predicated region
        $region33: #{tpu_custom_call.1} parent=31 // pred_check
          %p197 = pneg %p39
        $region34: #{tpu_custom_call.1} parent=31 // pred_check_branch
          %199 = sbr.rel (%p197) target = $region36
        $region35: #{tpu_custom_call.1} parent=31 // pred_region
          %s200 = sand.u32 %s29, 1
          %s201 = scalar_lea.sflag [#allocation4], %s200
          %s202 = sand.u32 %s29, 1
          %s203 = smul.addr %s202, 128
          %s204 = scalar_lea.vmem [#allocation3], %s203
          %s205 = smul.u32 16, %s19
          %s206 = ssub.s32 25, %s205
          %p207 = scmp.lt.s32.totalorder %s206, 16
          %s208 = scalar_select %p207, %s206, 16
          %s209 = smul.u32 4, %s208
          %s210 = smul.u32 %s209, 2
          %s211 = ssub.s32 128, %s210
          %s212 = sshll.u32 %s211, 4
          %213 = vsyncadd %s201, %s212
          %p214 = scmp.ne.s32.totalorder 0, %s210
          %s215 = smul.addr %s205, 2
          %s216 = smul.addr %s215, 4
          %s217 = scalar_lea.hbm %s0, %s216
          %s218 = smul.u32 8, %s208
          %s219 = sshll.u32 %s217, 4
          %s220 = int_to_ptr.hbm [resolvable:$true] %s219
          %s221 = sshll.u32 %s204, 4
          %s222 = int_to_ptr.vmem [resolvable:$true] %s221
          %s223 = sshll.u32 %s218, 4
          %227 = dma.hbm_to_vmem [thread:$0]  (%p214), %s220, %s223, %s222, %s201, 128, 128, 8
        $region36: #{tpu_custom_call.1} parent=31 // pred_fallthru
          _
      $region32: #{tpu_custom_call.1} parent=5 // pred_fallthru
        _
      %p228 = scmp.le.s32.totalorder 1, %s19
      %p229 = scmp.lt.s32.totalorder %s19, 3
      %p230 = pnand %p228, %p229
      %p231 = pneg %p230
      // Predicated region
      $region37: #{tpu_custom_call.1} parent=5 // pred_check
        _
      $region38: #{tpu_custom_call.1} parent=5 // pred_check_branch
        %233 = sbr.rel (%p230) target = $region40
      $region39: #{tpu_custom_call.1} parent=5 // pred_region
        %s234 = ssub.s32 %s19, 1
        %s235 = sand.u32 %s32, 1
        %s236 = scalar_lea.sflag [#allocation4], %s235
        %s237 = sand.u32 %s32, 1
        %s238 = smul.addr %s237, 128
        %s239 = scalar_lea.vmem [#allocation3], %s238
        // Predicated region
        $region41: #{tpu_custom_call.1} parent=39 // pred_check
          %p240 = pneg %p45
        $region42: #{tpu_custom_call.1} parent=39 // pred_check_branch
          %242 = sbr.rel (%p240) target = $region44
        $region43: #{tpu_custom_call.1} parent=39 // pred_region
          %244 = dma.done %s236, 2048
        $region44: #{tpu_custom_call.1} parent=39 // pred_fallthru
          _
        // Predicated region
        $region45: #{tpu_custom_call.1} parent=39 // pred_check
          %p245 = pneg %p66
        $region46: #{tpu_custom_call.1} parent=39 // pred_check_branch
          %247 = sbr.rel (%p245) target = $region48
        $region47: #{tpu_custom_call.1} parent=39 // pred_region
          %249 = dma.done [#allocation7], 2048
        $region48: #{tpu_custom_call.1} parent=39 // pred_fallthru
          _
        %s250 = sand.u32 %s32, 1
        %s251 = scalar_lea.sflag [#allocation4], %s250
        %s252 = sand.u32 %s32, 1
        %s253 = smul.addr %s252, 128
        %s254 = scalar_lea.vmem [#allocation3], %s253
        %p255 = pneg %p45
        %p256 = pneg %p42
        %p257 = pneg %p66
        %p258 = pneg %p63
        %p259 = pneg %p87
        %p260 = pneg %p84
        %p261 = pneg %p108
        %p262 = pneg %p105
        %p263 = pneg %p129
        %p264 = pneg %p126
        %p265 = pneg %p155
        %p266 = pneg %p152
        %s267 = sand.u32 %s142, 1
        %s268 = scalar_lea.sflag [#allocation5], %s267
        %s269 = sand.u32 %s142, 1
        %s270 = scalar_lea.vmem [#allocation8], %s269
        %s271 = smul.u32 16, %s24
        %s272 = ssub.s32 25, %s271
        %p273 = scmp.lt.s32.totalorder %s272, 16
        %s274 = scalar_select %p273, %s272, 16
        %s275 = smul.u32 4, %s274
        %s276 = smul.u32 %s275, 2
        %v277 = vld [vmem:[%s239] sm:$0xff]
        %v278 = vld [vmem:[%s239 + $0x8] sm:$0xff]
        %v279 = vld [vmem:[%s239 + $0x10] sm:$0xff]
        %v280 = vld [vmem:[%s239 + $0x18] sm:$0xff]
        %v281 = vld [vmem:[%s239 + $0x20] sm:$0xff]
        %v282 = vld [vmem:[%s239 + $0x28] sm:$0xff]
        %v283 = vld [vmem:[%s239 + $0x30] sm:$0xff]
        %v284 = vld [vmem:[%s239 + $0x38] sm:$0xff]
        %v285 = vld [vmem:[%s239 + $0x40] sm:$0xff]
        %v286 = vld [vmem:[%s239 + $0x48] sm:$0xff]
        %v287 = vld [vmem:[%s239 + $0x50] sm:$0xff]
        %v288 = vld [vmem:[%s239 + $0x58] sm:$0xff]
        %v289 = vld [vmem:[%s239 + $0x60] sm:$0xff]
        %v290 = vld [vmem:[%s239 + $0x68] sm:$0xff]
        %v291 = vld [vmem:[%s239 + $0x70] sm:$0xff]
        %v292 = vld [vmem:[%s239 + $0x78] sm:$0xff]
        %v293 = vld [vmem:[#allocation6] sm:$0xf]
        %v294 = vld [vmem:[#allocation6 + $0x4] sm:$0xf]
        %v295 = vld [vmem:[#allocation6 + $0x8] sm:$0xf]
        %v296 = vld [vmem:[#allocation6 + $0xc] sm:$0xf]
        %v297 = vld [vmem:[#allocation6 + $0x10] sm:$0xf]
        %v298 = vld [vmem:[#allocation6 + $0x14] sm:$0xf]
        %v299 = vld [vmem:[#allocation6 + $0x18] sm:$0xf]
        %v300 = vld [vmem:[#allocation6 + $0x1c] sm:$0xf]
        %v301 = vld [vmem:[#allocation6 + $0x20] sm:$0xf]
        %v302 = vld [vmem:[#allocation6 + $0x24] sm:$0xf]
        %v303 = vld [vmem:[#allocation6 + $0x28] sm:$0xf]
        %v304 = vld [vmem:[#allocation6 + $0x2c] sm:$0xf]
        %v305 = vld [vmem:[#allocation6 + $0x30] sm:$0xf]
        %v306 = vld [vmem:[#allocation6 + $0x34] sm:$0xf]
        %v307 = vld [vmem:[#allocation6 + $0x38] sm:$0xf]
        %v308 = vld [vmem:[#allocation6 + $0x3c] sm:$0xf]
        %v309 = vld [vmem:[#allocation6 + $0x40] sm:$0xf]
        %v310 = vld [vmem:[#allocation6 + $0x44] sm:$0xf]
        %v311 = vld [vmem:[#allocation6 + $0x48] sm:$0xf]
        %v312 = vld [vmem:[#allocation6 + $0x4c] sm:$0xf]
        %v313 = vld [vmem:[#allocation6 + $0x50] sm:$0xf]
        %v314 = vld [vmem:[#allocation6 + $0x54] sm:$0xf]
        %v315 = vld [vmem:[#allocation6 + $0x58] sm:$0xf]
        %v316 = vld [vmem:[#allocation6 + $0x5c] sm:$0xf]
        %v317 = vld [vmem:[#allocation6 + $0x60] sm:$0xf]
        %v318 = vld [vmem:[#allocation6 + $0x64] sm:$0xf]
        %v319 = vld [vmem:[#allocation6 + $0x68] sm:$0xf]
        %v320 = vld [vmem:[#allocation6 + $0x6c] sm:$0xf]
        %v321 = vld [vmem:[#allocation6 + $0x70] sm:$0xf]
        %v322 = vld [vmem:[#allocation6 + $0x74] sm:$0xf]
        %v323 = vld [vmem:[#allocation6 + $0x78] sm:$0xf]
        %v324 = vld [vmem:[#allocation6 + $0x7c] sm:$0xf]
        %v325 = vld [vmem:[%s2] sm:$0x1]
        %v327 = vperm.slane %v325, 0
        %v345 = vunpack.c.l.b16 %v277
        %v346 = vunpack.c.h.b16 %v277
        %v347 = vunpack.c.l.b16 %v278
        %v348 = vunpack.c.h.b16 %v278
        %v349 = vunpack.c.l.b16 %v279
        %v350 = vunpack.c.h.b16 %v279
        %v351 = vunpack.c.l.b16 %v280
        %v352 = vunpack.c.h.b16 %v280
        %v353 = vunpack.c.l.b16 %v281
        %v354 = vunpack.c.h.b16 %v281
        %v355 = vunpack.c.l.b16 %v282
        %v356 = vunpack.c.h.b16 %v282
        %v357 = vunpack.c.l.b16 %v283
        %v358 = vunpack.c.h.b16 %v283
        %v359 = vunpack.c.l.b16 %v284
        %v360 = vunpack.c.h.b16 %v284
        %v361 = vunpack.c.l.b16 %v285
        %v362 = vunpack.c.h.b16 %v285
        %v363 = vunpack.c.l.b16 %v286
        %v364 = vunpack.c.h.b16 %v286
        %v365 = vunpack.c.l.b16 %v287
        %v366 = vunpack.c.h.b16 %v287
        %v367 = vunpack.c.l.b16 %v288
        %v368 = vunpack.c.h.b16 %v288
        %v369 = vunpack.c.l.b16 %v289
        %v370 = vunpack.c.h.b16 %v289
        %v371 = vunpack.c.l.b16 %v290
        %v372 = vunpack.c.h.b16 %v290
        %v373 = vunpack.c.l.b16 %v291
        %v374 = vunpack.c.h.b16 %v291
        %v375 = vunpack.c.l.b16 %v292
        %v376 = vunpack.c.h.b16 %v292
        %v377 = vpack.c.b16 %v347, %v345
        %v378 = vpack.c.b16 %v348, %v346
        %v379 = vpack.c.b16 %v351, %v349
        %v380 = vpack.c.b16 %v352, %v350
        %v381 = vpack.c.b16 %v355, %v353
        %v382 = vpack.c.b16 %v356, %v354
        %v383 = vpack.c.b16 %v359, %v357
        %v384 = vpack.c.b16 %v360, %v358
        %v385 = vpack.c.b16 %v363, %v361
        %v386 = vpack.c.b16 %v364, %v362
        %v387 = vpack.c.b16 %v367, %v365
        %v388 = vpack.c.b16 %v368, %v366
        %v389 = vpack.c.b16 %v371, %v369
        %v390 = vpack.c.b16 %v372, %v370
        %v391 = vpack.c.b16 %v375, %v373
        %v392 = vpack.c.b16 %v376, %v374
        %v441 = vunpack.c.l.b16 %v293
        %v442 = vunpack.c.l.b16 %v294
        %v443 = vunpack.c.l.b16 %v295
        %v444 = vunpack.c.l.b16 %v296
        %v445 = vunpack.c.l.b16 %v297
        %v446 = vunpack.c.l.b16 %v298
        %v447 = vunpack.c.l.b16 %v299
        %v448 = vunpack.c.l.b16 %v300
        %v449 = vunpack.c.l.b16 %v301
        %v450 = vunpack.c.l.b16 %v302
        %v451 = vunpack.c.l.b16 %v303
        %v452 = vunpack.c.l.b16 %v304
        %v453 = vunpack.c.l.b16 %v305
        %v454 = vunpack.c.l.b16 %v306
        %v455 = vunpack.c.l.b16 %v307
        %v456 = vunpack.c.l.b16 %v308
        %v457 = vunpack.c.l.b16 %v309
        %v458 = vunpack.c.l.b16 %v310
        %v459 = vunpack.c.l.b16 %v311
        %v460 = vunpack.c.l.b16 %v312
        %v461 = vunpack.c.l.b16 %v313
        %v462 = vunpack.c.l.b16 %v314
        %v463 = vunpack.c.l.b16 %v315
        %v464 = vunpack.c.l.b16 %v316
        %v465 = vunpack.c.l.b16 %v317
        %v466 = vunpack.c.l.b16 %v318
        %v467 = vunpack.c.l.b16 %v319
        %v468 = vunpack.c.l.b16 %v320
        %v469 = vunpack.c.l.b16 %v321
        %v470 = vunpack.c.l.b16 %v322
        %v471 = vunpack.c.l.b16 %v323
        %v472 = vunpack.c.l.b16 %v324
        %v473 = vpack.c.b16 %v442, %v441
        %v474 = vpack.c.b16 %v444, %v443
        %v475 = vpack.c.b16 %v446, %v445
        %v476 = vpack.c.b16 %v448, %v447
        %v477 = vpack.c.b16 %v450, %v449
        %v478 = vpack.c.b16 %v452, %v451
        %v479 = vpack.c.b16 %v454, %v453
        %v480 = vpack.c.b16 %v456, %v455
        %v481 = vpack.c.b16 %v458, %v457
        %v482 = vpack.c.b16 %v460, %v459
        %v483 = vpack.c.b16 %v462, %v461
        %v484 = vpack.c.b16 %v464, %v463
        %v485 = vpack.c.b16 %v466, %v465
        %v486 = vpack.c.b16 %v468, %v467
        %v487 = vpack.c.b16 %v470, %v469
        %v488 = vpack.c.b16 %v472, %v471
        %505 = vmatpush.bf16.msra.mxu0 %v480
        %506 = vmatpush.bf16.msra.mxu0 %v479
        %507 = vmatpush.bf16.msra.mxu0 %v478
        %508 = vmatpush.bf16.msra.mxu0 %v477
        %509 = vmatpush.bf16.msra.mxu0 %v476
        %510 = vmatpush.bf16.msra.mxu0 %v475
        %511 = vmatpush.bf16.msra.mxu0 %v474
        %512 = vmatpush.bf16.msra.mxu0 %v473
        %513 = vmatmul.bf16.gmra.mxu0 %v377
        %v514 = vpop.f32.mrf.mxu0
        %v515 = vadd.f32 %v327, %v514
        %v516 = vpop.f32.mrf.mxu0
        %v517 = vadd.f32 %v327, %v516
        %518 = vmatmul.bf16.gmra.mxu0 %v379
        %v519 = vpop.f32.mrf.mxu0
        %v520 = vadd.f32 %v327, %v519
        %v521 = vpop.f32.mrf.mxu0
        %v522 = vadd.f32 %v327, %v521
        %523 = vmatmul.bf16.gmra.mxu0 %v381
        %v524 = vpop.f32.mrf.mxu0
        %v525 = vadd.f32 %v327, %v524
        %v526 = vpop.f32.mrf.mxu0
        %v527 = vadd.f32 %v327, %v526
        %528 = vmatmul.bf16.gmra.mxu0 %v383
        %v529 = vpop.f32.mrf.mxu0
        %v530 = vadd.f32 %v327, %v529
        %v531 = vpop.f32.mrf.mxu0
        %v532 = vadd.f32 %v327, %v531
        %533 = vmatmul.bf16.gmra.mxu0 %v385
        %v534 = vpop.f32.mrf.mxu0
        %v535 = vadd.f32 %v327, %v534
        %v536 = vpop.f32.mrf.mxu0
        %v537 = vadd.f32 %v327, %v536
        %538 = vmatmul.bf16.gmra.mxu0 %v387
        %v539 = vpop.f32.mrf.mxu0
        %v540 = vadd.f32 %v327, %v539
        %v541 = vpop.f32.mrf.mxu0
        %v542 = vadd.f32 %v327, %v541
        %543 = vmatmul.bf16.gmra.mxu0 %v389
        %v544 = vpop.f32.mrf.mxu0
        %v545 = vadd.f32 %v327, %v544
        %v546 = vpop.f32.mrf.mxu0
        %v547 = vadd.f32 %v327, %v546
        %548 = vmatmul.bf16.gmra.mxu0 %v391
        %v549 = vpop.f32.mrf.mxu0
        %v550 = vadd.f32 %v327, %v549
        %v551 = vpop.f32.mrf.mxu0
        %v552 = vadd.f32 %v327, %v551
        %553 = vdwg.mxu0
        %554 = vmatpush.bf16.msra.mxu0 %v488
        %555 = vmatpush.bf16.msra.mxu0 %v487
        %556 = vmatpush.bf16.msra.mxu0 %v486
        %557 = vmatpush.bf16.msra.mxu0 %v485
        %558 = vmatpush.bf16.msra.mxu0 %v484
        %559 = vmatpush.bf16.msra.mxu0 %v483
        %560 = vmatpush.bf16.msra.mxu0 %v482
        %561 = vmatpush.bf16.msra.mxu0 %v481
        %562 = vmatmul.bf16.gmra.mxu0 %v378
        %v563 = vpop.f32.mrf.mxu0
        %v564 = vadd.f32 %v515, %v563
        %v565 = vpop.f32.mrf.mxu0
        %v566 = vadd.f32 %v517, %v565
        %567 = vmatmul.bf16.gmra.mxu0 %v380
        %v568 = vpop.f32.mrf.mxu0
        %v569 = vadd.f32 %v520, %v568
        %v570 = vpop.f32.mrf.mxu0
        %v571 = vadd.f32 %v522, %v570
        %572 = vmatmul.bf16.gmra.mxu0 %v382
        %v573 = vpop.f32.mrf.mxu0
        %v574 = vadd.f32 %v525, %v573
        %v575 = vpop.f32.mrf.mxu0
        %v576 = vadd.f32 %v527, %v575
        %577 = vmatmul.bf16.gmra.mxu0 %v384
        %v578 = vpop.f32.mrf.mxu0
        %v579 = vadd.f32 %v530, %v578
        %v580 = vpop.f32.mrf.mxu0
        %v581 = vadd.f32 %v532, %v580
        %582 = vmatmul.bf16.gmra.mxu0 %v386
        %v583 = vpop.f32.mrf.mxu0
        %v584 = vadd.f32 %v535, %v583
        %v585 = vpop.f32.mrf.mxu0
        %v586 = vadd.f32 %v537, %v585
        %587 = vmatmul.bf16.gmra.mxu0 %v388
        %v588 = vpop.f32.mrf.mxu0
        %v589 = vadd.f32 %v540, %v588
        %v590 = vpop.f32.mrf.mxu0
        %v591 = vadd.f32 %v542, %v590
        %592 = vmatmul.bf16.gmra.mxu0 %v390
        %v593 = vpop.f32.mrf.mxu0
        %v594 = vadd.f32 %v545, %v593
        %v595 = vpop.f32.mrf.mxu0
        %v596 = vadd.f32 %v547, %v595
        %597 = vmatmul.bf16.gmra.mxu0 %v392
        %v598 = vpop.f32.mrf.mxu0
        %v599 = vadd.f32 %v550, %v598
        %v600 = vpop.f32.mrf.mxu0
        %v601 = vadd.f32 %v552, %v600
        %602 = vdwg.mxu0
        %v603 = vmax.f32 %v564, 0.0
        %v604 = vmax.f32 %v566, 0.0
        %v605 = vmax.f32 %v569, 0.0
        %v606 = vmax.f32 %v571, 0.0
        %v607 = vmax.f32 %v574, 0.0
        %v608 = vmax.f32 %v576, 0.0
        %v609 = vmax.f32 %v579, 0.0
        %v610 = vmax.f32 %v581, 0.0
        %v611 = vmax.f32 %v584, 0.0
        %v612 = vmax.f32 %v586, 0.0
        %v613 = vmax.f32 %v589, 0.0
        %v614 = vmax.f32 %v591, 0.0
        %v615 = vmax.f32 %v594, 0.0
        %v616 = vmax.f32 %v596, 0.0
        %v617 = vmax.f32 %v599, 0.0
        %v618 = vmax.f32 %v601, 0.0
        %v619 = vld [vmem:[%s3] sm:$0x1]
        %v621 = vperm.slane %v619, 0
        %v623 = vmul.f32 %v603, %v621
        %v624 = vmul.f32 %v604, %v621
        %v625 = vmul.f32 %v605, %v621
        %v626 = vmul.f32 %v606, %v621
        %v627 = vmul.f32 %v607, %v621
        %v628 = vmul.f32 %v608, %v621
        %v629 = vmul.f32 %v609, %v621
        %v630 = vmul.f32 %v610, %v621
        %v631 = vmul.f32 %v611, %v621
        %v632 = vmul.f32 %v612, %v621
        %v633 = vmul.f32 %v613, %v621
        %v634 = vmul.f32 %v614, %v621
        %v635 = vmul.f32 %v615, %v621
        %v636 = vmul.f32 %v616, %v621
        %v637 = vmul.f32 %v617, %v621
        %v638 = vmul.f32 %v618, %v621
        %639 = vadd.xlane.f32.xlu0 %v623
        %v640 = vpop.xlane.xlu0 %639
        %641 = vadd.xlane.f32.xlu0 %v624
        %v642 = vpop.xlane.xlu0 %641
        %643 = vadd.xlane.f32.xlu0 %v625
        %v644 = vpop.xlane.xlu0 %643
        %645 = vadd.xlane.f32.xlu0 %v626
        %v646 = vpop.xlane.xlu0 %645
        %647 = vadd.xlane.f32.xlu0 %v627
        %v648 = vpop.xlane.xlu0 %647
        %649 = vadd.xlane.f32.xlu0 %v628
        %v650 = vpop.xlane.xlu0 %649
        %651 = vadd.xlane.f32.xlu0 %v629
        %v652 = vpop.xlane.xlu0 %651
        %653 = vadd.xlane.f32.xlu0 %v630
        %v654 = vpop.xlane.xlu0 %653
        %655 = vadd.xlane.f32.xlu0 %v631
        %v656 = vpop.xlane.xlu0 %655
        %657 = vadd.xlane.f32.xlu0 %v632
        %v658 = vpop.xlane.xlu0 %657
        %659 = vadd.xlane.f32.xlu0 %v633
        %v660 = vpop.xlane.xlu0 %659
        %661 = vadd.xlane.f32.xlu0 %v634
        %v662 = vpop.xlane.xlu0 %661
        %663 = vadd.xlane.f32.xlu0 %v635
        %v664 = vpop.xlane.xlu0 %663
        %665 = vadd.xlane.f32.xlu0 %v636
        %v666 = vpop.xlane.xlu0 %665
        %667 = vadd.xlane.f32.xlu0 %v637
        %v668 = vpop.xlane.xlu0 %667
        %669 = vadd.xlane.f32.xlu0 %v638
        %v670 = vpop.xlane.xlu0 %669
        %s671 = sld [smem:[#allocation2]]
        %v672 = vstv %s671
        %v673 = vadd.f32 %v640, %v672
        %v674 = vadd.f32 %v642, %v672
        %v675 = vadd.f32 %v644, %v672
        %v676 = vadd.f32 %v646, %v672
        %v677 = vadd.f32 %v648, %v672
        %v678 = vadd.f32 %v650, %v672
        %v679 = vadd.f32 %v652, %v672
        %v680 = vadd.f32 %v654, %v672
        %v681 = vadd.f32 %v656, %v672
        %v682 = vadd.f32 %v658, %v672
        %v683 = vadd.f32 %v660, %v672
        %v684 = vadd.f32 %v662, %v672
        %v685 = vadd.f32 %v664, %v672
        %v686 = vadd.f32 %v666, %v672
        %v687 = vadd.f32 %v668, %v672
        %v688 = vadd.f32 %v670, %v672
        %v705 = vlaneseq
        %v706 = vand.u32 %v705, 127
        %v707 = vperm.slane %v673, %v706
        %v708 = vadd.s32 %v706, 4294967288
        %v709 = vperm.slane %v674, %v708
        %vm710 = vcmask 130112
        %v711 = vsel %vm710, %v709, %v707
        %v712 = vadd.s32 %v706, 4294967280
        %v713 = vperm.slane %v675, %v712
        %vm714 = vcmask 195712
        %v715 = vsel %vm714, %v713, %v711
        %v716 = vadd.s32 %v706, 4294967272
        %v717 = vperm.slane %v676, %v716
        %vm718 = vcmask 261312
        %v719 = vsel %vm718, %v717, %v715
        %v720 = vadd.s32 %v706, 4294967264
        %v721 = vperm.slane %v677, %v720
        %vm722 = vcmask 326912
        %v723 = vsel %vm722, %v721, %v719
        %v724 = vadd.s32 %v706, 4294967256
        %v725 = vperm.slane %v678, %v724
        %vm726 = vcmask 392512
        %v727 = vsel %vm726, %v725, %v723
        %v728 = vadd.s32 %v706, 4294967248
        %v729 = vperm.slane %v679, %v728
        %vm730 = vcmask 458112
        %v731 = vsel %vm730, %v729, %v727
        %v732 = vadd.s32 %v706, 4294967240
        %v733 = vperm.slane %v680, %v732
        %vm734 = vcmask 523712
        %v735 = vsel %vm734, %v733, %v731
        %v736 = vadd.s32 %v706, 4294967232
        %v737 = vperm.slane %v681, %v736
        %vm738 = vcmask 589312
        %v739 = vsel %vm738, %v737, %v735
        %v740 = vadd.s32 %v706, 4294967224
        %v741 = vperm.slane %v682, %v740
        %vm742 = vcmask 654912
        %v743 = vsel %vm742, %v741, %v739
        %v744 = vadd.s32 %v706, 4294967216
        %v745 = vperm.slane %v683, %v744
        %vm746 = vcmask 720512
        %v747 = vsel %vm746, %v745, %v743
        %v748 = vadd.s32 %v706, 4294967208
        %v749 = vperm.slane %v684, %v748
        %vm750 = vcmask 786112
        %v751 = vsel %vm750, %v749, %v747
        %v752 = vadd.s32 %v706, 4294967200
        %v753 = vperm.slane %v685, %v752
        %vm754 = vcmask 851712
        %v755 = vsel %vm754, %v753, %v751
        %v756 = vadd.s32 %v706, 4294967192
        %v757 = vperm.slane %v686, %v756
        %vm758 = vcmask 917312
        %v759 = vsel %vm758, %v757, %v755
        %v760 = vadd.s32 %v706, 4294967184
        %v761 = vperm.slane %v687, %v760
        %vm762 = vcmask 982912
        %v763 = vsel %vm762, %v761, %v759
        %v764 = vadd.s32 %v706, 4294967176
        %v765 = vperm.slane %v688, %v764
        %vm766 = vcmask 1048512
        %v767 = vsel %vm766, %v765, %v763
        %769 = vst [vmem:[%s270] sm:$0x1] %v767
        %s770 = sand.u32 %s142, 1
        %s771 = scalar_lea.sflag [#allocation5], %s770
        %s772 = sand.u32 %s142, 1
        %s773 = scalar_lea.vmem [#allocation8], %s772
        // Predicated region
        $region49: #{tpu_custom_call.1} parent=39 // pred_check
          %p774 = pneg %p152
        $region50: #{tpu_custom_call.1} parent=39 // pred_check_branch
          %776 = sbr.rel (%p774) target = $region52
        $region51: #{tpu_custom_call.1} parent=39 // pred_region
          %778 = vsyncadd %s771, 0
          %s779 = scalar_lea.hbm %s5, %s24
          %s781 = sshll.u32 %s773, 4
          %s782 = int_to_ptr.vmem [resolvable:$true] %s781
          %s783 = sshll.u32 %s779, 4
          %s784 = int_to_ptr.hbm [resolvable:$true] %s783
          %786 = dma.vmem_to_hbm [thread:$0]  %s782, 16, %s784, %s771
        $region52: #{tpu_custom_call.1} parent=39 // pred_fallthru
          _
      $region40: #{tpu_custom_call.1} parent=5 // pred_fallthru
        _
      %p787 = scmp.le.s32.totalorder 2, %s19
      // Predicated region
      $region53: #{tpu_custom_call.1} parent=5 // pred_check
        %p788 = pneg %p787
      $region54: #{tpu_custom_call.1} parent=5 // pred_check_branch
        %790 = sbr.rel (%p788) target = $region56
      $region55: #{tpu_custom_call.1} parent=5 // pred_region
        %s791 = ssub.s32 %s19, 2
        // Predicated region
        $region57: #{tpu_custom_call.1} parent=55 // pred_check
          %p792 = pneg %p158
        $region58: #{tpu_custom_call.1} parent=55 // pred_check_branch
          %794 = sbr.rel (%p792) target = $region60
        $region59: #{tpu_custom_call.1} parent=55 // pred_region
          %s795 = sand.u32 %s143, 1
          %s796 = scalar_lea.sflag [#allocation5], %s795
          %s797 = sand.u32 %s143, 1
          %s798 = scalar_lea.vmem [#allocation8], %s797
          %800 = dma.done %s796, 16
        $region60: #{tpu_custom_call.1} parent=55 // pred_fallthru
          _
      $region56: #{tpu_custom_call.1} parent=5 // pred_fallthru
        _
    $region6: #{tpu_custom_call.1} parent=1 // loop_footer
      %s23 = sadd.s32 1, %s19
    $region7: #{tpu_custom_call.1} parent=1 // loop_footer_branch
      %18 = sbr.rel target = $region3
    $region8: #{tpu_custom_call.1} parent=1 // loop_exit
      _
    %801 = vsyncpa [#allocation4], 1
    %s802 = scalar_lea.sflag [#allocation4], 1
    %803 = vsyncpa %s802, 1
    %804 = vsyncpa [#allocation7], 1
    %805 = vsyncpa [#allocation5], 1
    %s806 = scalar_lea.sflag [#allocation5], 1
    %807 = vsyncpa %s806, 1

</llo_original>
